<compile_context>
chip_gen: v5e
topology: v5e:2x2
jax: 0.10.0
libtpu: 0.0.40
codegen_flags: <defaults>
</compile_context>

<pallas_src>
import functools

import jax
import jax.numpy as jnp
from jax import lax
from jax.experimental import pallas as pl
from jax.experimental.pallas import tpu as pltpu


_VMEM_LIMIT = 48 * 1024 * 1024  # below v7x physical (64 MiB), safe on v5e/v6e


def _round_up(x, m):
    return (x + m - 1) // m * m


# ----------------------------- tiled GEMM (+bias) -----------------------------
# Used only for fc1 now (the LSTM input projections are fused into the
# recurrent kernel below).

def _linear_kernel(x_ref, w_ref, b_ref, o_ref):
    # grid = (M//tm, N//tn, K//tk); K (reduction) innermost.
    # Accumulate directly into the resident f32 output block: no acc scratch,
    # no finalize copy (review item: "drop the separate acc_ref").
    k = pl.program_id(2)
    prod = jnp.dot(x_ref[...], w_ref[...], preferred_element_type=jnp.float32)

    @pl.when(k == 0)
    def _():
        o_ref[...] = prod + b_ref[...]          # bias broadcast over rows

    @pl.when(k != 0)
    def _():
        o_ref[...] += prod


def pallas_linear(x2d, w_t, b, *, tm=512, tn=2048, tk_max=1024):
    """x2d: (M, K), w_t: (K, N), b: (N,) -> (M, N) f32.

    Operands are cast to bf16 (2x MXU throughput, half the DMA bytes); the
    accumulation and output stay f32.  When K <= tk_max the reduction grid
    collapses to a single step.
    """
    M, K = x2d.shape
    N = w_t.shape[1]
    tm = min(tm, _round_up(M, 8))
    tn = min(tn, _round_up(N, 128))
    tk = K if K <= tk_max else tk_max
    Mp, Np = _round_up(M, tm), _round_up(N, tn)
    Kp = _round_up(K, tk)

    xp = x2d if (Mp == M and Kp == K) else jnp.pad(x2d, ((0, Mp - M), (0, Kp - K)))
    wp = w_t if (Kp == K and Np == N) else jnp.pad(w_t, ((0, Kp - K), (0, Np - N)))
    bp = (b if Np == N else jnp.pad(b, (0, Np - N))).reshape(1, Np).astype(jnp.float32)

    xp = xp.astype(jnp.bfloat16)
    wp = wp.astype(jnp.bfloat16)

    out = pl.pallas_call(
        _linear_kernel,
        out_shape=jax.ShapeDtypeStruct((Mp, Np), jnp.float32),
        grid=(Mp // tm, Np // tn, Kp // tk),
        in_specs=[
            pl.BlockSpec((tm, tk), lambda i, j, k: (i, k)),
            pl.BlockSpec((tk, tn), lambda i, j, k: (k, j)),
            pl.BlockSpec((1, tn), lambda i, j, k: (0, j)),
        ],
        out_specs=pl.BlockSpec((tm, tn), lambda i, j, k: (i, j)),
        compiler_params=pltpu.CompilerParams(
            dimension_semantics=("parallel", "parallel", "arbitrary"),
            vmem_limit_bytes=_VMEM_LIMIT),
    )(xp, wp, bp)

    if Mp != M or Np != N:
        out = out[:M, :N]
    return out


# ----------------------------- fused LSTM layer -----------------------------

def _sigmoid(x):
    # Exact logistic via one EUP tanh + VALU mul/add (no divide): keeps the
    # single-slot EUP pressure of the serial recurrence to one push per gate.
    return 0.5 * (jnp.tanh(0.5 * x) + 1.0)


def _lstm_layer_kernel(x_ref, wih_hbm, whh_hbm, b_ref, out_ref,
                       wih_vmem, whh_vmem, xp_scr, h_scr, c_scr, dma_sem,
                       *, unroll):
    # grid = (batch_shards, time_chunks); time is the serial ("arbitrary") axis.
    # x_ref   : (tt, Bb, Hin) f32 layer-input chunk
    # wih_hbm : (Hin, 4H) bf16 W_ih^T in HBM (memory_space=pl.ANY)
    # whh_hbm : (H,   4H) bf16 W_hh^T in HBM (memory_space=pl.ANY)
    # b_ref   : (1, 4H) f32 fused bias (b_ih + b_hh)
    # out_ref : (tt, Bb, H) f32 output chunk
    # wih_vmem/whh_vmem: resident bf16 weight copies (single-buffered)
    # xp_scr  : (tt*Bb, 4H) f32 per-chunk input projection (never hits HBM)
    # h_scr/c_scr: (Bb, H) recurrent state, persists across grid steps
    tc = pl.program_id(1)

    @pl.when(tc == 0)
    def _():
        # One-time (per batch shard / per core) weight residency.
        cp_i = pltpu.make_async_copy(wih_hbm, wih_vmem, dma_sem.at[0])
        cp_h = pltpu.make_async_copy(whh_hbm, whh_vmem, dma_sem.at[1])
        cp_i.start()
        cp_h.start()
        cp_i.wait()
        cp_h.wait()
        h_scr[...] = jnp.zeros_like(h_scr)
        c_scr[...] = jnp.zeros_like(c_scr)

    tt, Bb, Hin = x_ref.shape
    Hp = h_scr.shape[-1]

    # Fused input projection for the whole time chunk: one fat MXU matmul
    # (bf16 operands, f32 accumulation); the result stays in VMEM scratch
    # instead of round-tripping HBM as a (Tp, Bp, 4H) tensor.
    x2d = x_ref[...].reshape(tt * Bb, Hin).astype(jnp.bfloat16)
    xp_scr[...] = (jnp.dot(x2d, wih_vmem[...], preferred_element_type=jnp.float32)
                   + b_ref[...])

    whh = whh_vmem[...]          # hoisted: one VMEM load per chunk

    def step(t, carry):
        h, c = carry
        row0 = pl.multiple_of(t * Bb, 8)
        gates = (xp_scr[pl.ds(row0, Bb), :]
                 + jnp.dot(h.astype(jnp.bfloat16), whh,
                           preferred_element_type=jnp.float32))
        # PyTorch gate order: i, f, g, o (gate slices are 128-lane aligned).
        i = _sigmoid(gates[:, 0:Hp])
        f = _sigmoid(gates[:, Hp:2 * Hp])
        g = jnp.tanh(gates[:, 2 * Hp:3 * Hp])
        o = _sigmoid(gates[:, 3 * Hp:4 * Hp])
        c = f * c + i * g
        h = o * jnp.tanh(c)
        out_ref[t] = h
        return h, c

    # Partial unroll: LLO visibility without blowing the 64-vreg file.
    h, c = lax.fori_loop(0, tt, step, (h_scr[...], c_scr[...]), unroll=unroll)
    h_scr[...] = h
    c_scr[...] = c


def pallas_lstm_layer(y_tbh, w_ih_t, w_hh_t, bias, *, tt, batch_shards=1, unroll=4):
    """One LSTM layer, (Tp, Bp, Hin_p) f32 -> (Tp, Bp, Hp) f32, zero init state.

    w_ih_t: (Hin_p, 4Hp) bf16, w_hh_t: (Hp, 4Hp) bf16, bias: (4Hp,) f32.
    """
    Tp, Bp, Hin_p = y_tbh.shape
    Hp = w_hh_t.shape[0]
    G = 4 * Hp
    assert Tp % tt == 0 and Bp % (8 * batch_shards) == 0
    Bb = Bp // batch_shards

    # TODO(synk): for very large H (H*4H bf16 weights > ~32 MiB) tile W along
    # the 4H gate axis instead of keeping both matrices fully resident (v7x).
    kernel = functools.partial(_lstm_layer_kernel, unroll=unroll)
    out = pl.pallas_call(
        kernel,
        out_shape=jax.ShapeDtypeStruct((Tp, Bp, Hp), jnp.float32),
        grid=(batch_shards, Tp // tt),
        in_specs=[
            pl.BlockSpec((tt, Bb, Hin_p), lambda b, c: (c, b, 0)),
            pl.BlockSpec(memory_space=pl.ANY),   # W_ih^T: no auto double-buffer
            pl.BlockSpec(memory_space=pl.ANY),   # W_hh^T: no auto double-buffer
            pl.BlockSpec((1, G), lambda b, c: (0, 0)),
        ],
        out_specs=pl.BlockSpec((tt, Bb, Hp), lambda b, c: (c, b, 0)),
        scratch_shapes=[
            pltpu.VMEM((Hin_p, G), jnp.bfloat16),    # resident W_ih^T
            pltpu.VMEM((Hp, G), jnp.bfloat16),       # resident W_hh^T
            pltpu.VMEM((tt * Bb, G), jnp.float32),   # per-chunk xproj
            pltpu.VMEM((Bb, Hp), jnp.float32),       # h state
            pltpu.VMEM((Bb, Hp), jnp.float32),       # c state
            pltpu.SemaphoreType.DMA((2,)),
        ],
        compiler_params=pltpu.CompilerParams(
            # batch shards are independent (v7x 2-TC win); time is serial.
            dimension_semantics=("parallel", "arbitrary"),
            vmem_limit_bytes=_VMEM_LIMIT),
    )(y_tbh, w_ih_t, w_hh_t, bias.reshape(1, G))
    return out


# ----------------------------- Encoder wrapper -----------------------------

def init_encoder_params(key, input_dim, hidden_dim, num_layers):
    ks = jax.random.split(key, 2 + 4 * num_layers)
    scale = 0.1
    params = {
        # Weights stored pre-transposed (done once, not per forward call).
        "fc1_w_t": scale * jax.random.normal(ks[0], (input_dim, hidden_dim), jnp.float32),
        "fc1_b": scale * jax.random.normal(ks[1], (hidden_dim,), jnp.float32),
        "lstm": [],
    }
    in_dim = hidden_dim
    for l in range(num_layers):
        k0, k1, k2, k3 = ks[2 + 4 * l: 6 + 4 * l]
        w_ih = scale * jax.random.normal(k0, (4 * hidden_dim, in_dim), jnp.float32)
        w_hh = scale * jax.random.normal(k1, (4 * hidden_dim, hidden_dim), jnp.float32)
        b_ih = scale * jax.random.normal(k2, (4 * hidden_dim,), jnp.float32)
        b_hh = scale * jax.random.normal(k3, (4 * hidden_dim,), jnp.float32)
        params["lstm"].append({
            "w_ih_t": w_ih.T,        # (in_dim, 4H)
            "w_hh_t": w_hh.T,        # (H, 4H)
            "bias": b_ih + b_hh,     # fused once
        })
        in_dim = hidden_dim
    return params


def _pad_gate_cols(m, H, Hp):
    """(rows, 4H) -> (rows, 4Hp) with per-gate zero padding (i|f|g|o layout)."""
    rows = m.shape[0]
    m4 = m.reshape(rows, 4, H)
    m4 = jnp.pad(m4, ((0, 0), (0, 0), (0, Hp - H)))
    return m4.reshape(rows, 4 * Hp)


def encoder_forward(params, x, *, time_chunk=32, unroll=4):
    """x: (B, T, input_dim) -> out: (B, T, hidden_dim)."""
    B, T, I = x.shape
    H = params["fc1_w_t"].shape[1]
    Hp = _round_up(H, 128)         # lane-aligned hidden: dense gate slices/stores

    tt = min(time_chunk, T)        # timesteps per recurrent grid step
    Bp = _round_up(B, 8)           # sublane-dense batch
    Tp = _round_up(T, tt)
    # Shard batch across TensorCores (v7x) only when each shard stays 8-dense.
    batch_shards = 2 if (Bp >= 16 and Bp % 16 == 0) else 1

    # Single layout change in: (B, T, I) -> (T, B, I), kept through all layers.
    x_tbi = jnp.transpose(x, (1, 0, 2))
    if Bp != B or Tp != T:
        x_tbi = jnp.pad(x_tbi, ((0, Tp - T), (0, Bp - B), (0, 0)))

    # fc1 over all (padded) timesteps at once; output already lane-padded to Hp.
    fc1_w = jnp.pad(params["fc1_w_t"], ((0, 0), (0, Hp - H)))
    fc1_b = jnp.pad(params["fc1_b"], (0, Hp - H))
    y = pallas_linear(x_tbi.reshape(Tp * Bp, I), fc1_w, fc1_b)
    out = y.reshape(Tp, Bp, Hp)

    # Stacked LSTM: fused input projection + recurrence per layer.
    for lp in params["lstm"]:
        w_ih = _pad_gate_cols(lp["w_ih_t"], H, Hp)
        w_ih = jnp.pad(w_ih, ((0, Hp - H), (0, 0))).astype(jnp.bfloat16)
        w_hh = _pad_gate_cols(lp["w_hh_t"], H, Hp)
        w_hh = jnp.pad(w_hh, ((0, Hp - H), (0, 0))).astype(jnp.bfloat16)
        b = jnp.pad(lp["bias"].reshape(4, H), ((0, 0), (0, Hp - H))).reshape(4 * Hp)
        out = pallas_lstm_layer(out, w_ih, w_hh, b, tt=tt,
                                batch_shards=batch_shards, unroll=unroll)
        # TODO(synk): training-mode inter-layer dropout (p=0.3) not implemented (eval semantics).

    out = out[:T, :B, :H]                    # drop time/batch/hidden padding
    return jnp.transpose(out, (1, 0, 2))     # single layout change out: (B, T, H)


# ----------------------------- Pure-JAX reference -----------------------------

def encoder_reference(params, x):
    B, T, I = x.shape
    H = params["fc1_w_t"].shape[1]
    y = x.reshape(B * T, I) @ params["fc1_w_t"] + params["fc1_b"]
    out = y.reshape(B, T, H)
    for lp in params["lstm"]:
        w_ih_t, w_hh_t, bias = lp["w_ih_t"], lp["w_hh_t"], lp["bias"]
        h = jnp.zeros((B, H), jnp.float32)
        c = jnp.zeros((B, H), jnp.float32)
        hs = []
        for t in range(T):
            gates = out[:, t, :] @ w_ih_t + bias + h @ w_hh_t
            i = jax.nn.sigmoid(gates[:, 0:H])
            f = jax.nn.sigmoid(gates[:, H:2 * H])
            g = jnp.tanh(gates[:, 2 * H:3 * H])
            o = jax.nn.sigmoid(gates[:, 3 * H:4 * H])
            c = f * c + i * g
            h = o * jnp.tanh(c)
            hs.append(h)
        out = jnp.stack(hs, axis=1)
    return out


# ----------------------------- main -----------------------------

if __name__ == "__main__":
    input_dim, hidden_dim, num_layers = 16, 32, 2
    B, T = 2, 8

    key = jax.random.PRNGKey(0)
    kx, kp = jax.random.split(key)
    x = jax.random.normal(kx, (B, T, input_dim), jnp.float32)
    params = init_encoder_params(kp, input_dim, hidden_dim, num_layers)

    out = encoder_forward(params, x)
    out = jax.block_until_ready(out)

    ref = encoder_reference(params, x)
    assert out.shape == (B, T, hidden_dim)
    # bf16 MXU operands (f32 accumulation / f32 gate math) -> relaxed tolerance.
    max_err = float(jnp.max(jnp.abs(out - ref)))
    assert jnp.allclose(out, ref, atol=3e-2, rtol=3e-2), max_err

    print("KERNEL_OK")
</pallas_src>

<mosaic_0001>
module attributes {stable_mosaic.version = 11 : i64} {
  func.func @_linear_kernel(%arg0: i32, %arg1: i32, %arg2: i32, %arg3: memref<64x16xbf16, #tpu.memory_space<vmem>>, %arg4: memref<16x128xbf16, #tpu.memory_space<vmem>>, %arg5: memref<1x128xf32, #tpu.memory_space<vmem>>, %arg6: memref<64x128xf32, #tpu.memory_space<vmem>>) attributes {dimension_semantics = [#tpu.dimension_semantics<parallel>, #tpu.dimension_semantics<parallel>, #tpu.dimension_semantics<arbitrary>], iteration_bounds = array<i64: 1, 1, 1>, scalar_prefetch = 0 : i64, scratch_operands = 0 : i64, tpu.core_type = #tpu.core_type<tc>, window_params = [{transform_indices = @transform_0, window_bounds = array<i64: 64, 16>}, {transform_indices = @transform_1, window_bounds = array<i64: 16, 128>}, {transform_indices = @transform_2, window_bounds = array<i64: 1, 128>}, {transform_indices = @transform_3, window_bounds = array<i64: 64, 128>}]} {
    %c0 = arith.constant 0 : index
    %c0_0 = arith.constant 0 : index
    %0 = vector.load %arg3[%c0, %c0_0] : memref<64x16xbf16, #tpu.memory_space<vmem>>, vector<64x16xbf16>
    %c0_1 = arith.constant 0 : index
    %c0_2 = arith.constant 0 : index
    %1 = vector.load %arg4[%c0_1, %c0_2] : memref<16x128xbf16, #tpu.memory_space<vmem>>, vector<16x128xbf16>
    %cst = arith.constant dense<0.000000e+00> : vector<64x128xf32>
    %2 = tpu.matmul %0, %1, %cst {dimension_numbers = #tpu.dot_dimension_numbers<[1], [0], [0], [1], [0, 0, 1, 1], [], []>} : vector<64x16xbf16>, vector<16x128xbf16>, vector<64x128xf32> -> vector<64x128xf32>
    %c0_i32 = arith.constant 0 : i32
    %3 = arith.cmpi eq, %arg2, %c0_i32 : i32
    %4 = arith.extui %3 : i1 to i32
    %c0_i32_3 = arith.constant 0 : i32
    %5 = arith.cmpi ne, %4, %c0_i32_3 : i32
    scf.if %5 {
      %c0_6 = arith.constant 0 : index
      %c0_7 = arith.constant 0 : index
      %9 = vector.load %arg5[%c0_6, %c0_7] : memref<1x128xf32, #tpu.memory_space<vmem>>, vector<1x128xf32>
      %10 = vector.broadcast %9 : vector<1x128xf32> to vector<64x128xf32>
      %11 = arith.addf %2, %10 : vector<64x128xf32>
      %c0_8 = arith.constant 0 : index
      %c0_9 = arith.constant 0 : index
      %12 = vector.load %arg6[%c0_8, %c0_9] : memref<64x128xf32, #tpu.memory_space<vmem>>, vector<64x128xf32>
      tpu.vector_store %arg6[%c0_8, %c0_9], %11 {strides = array<i32>} : memref<64x128xf32, #tpu.memory_space<vmem>>, vector<64x128xf32>,
    } else {
    }
    %c0_i32_4 = arith.constant 0 : i32
    %6 = arith.cmpi ne, %arg2, %c0_i32_4 : i32
    %7 = arith.extui %6 : i1 to i32
    %c0_i32_5 = arith.constant 0 : i32
    %8 = arith.cmpi ne, %7, %c0_i32_5 : i32
    scf.if %8 {
      %c0_6 = arith.constant 0 : index
      %c0_7 = arith.constant 0 : index
      %9 = vector.load %arg6[%c0_6, %c0_7] : memref<64x128xf32, #tpu.memory_space<vmem>>, vector<64x128xf32>
      %10 = arith.addf %9, %2 : vector<64x128xf32>
      %c0_8 = arith.constant 0 : index
      %c0_9 = arith.constant 0 : index
      %11 = vector.load %arg6[%c0_8, %c0_9] : memref<64x128xf32, #tpu.memory_space<vmem>>, vector<64x128xf32>
      tpu.vector_store %arg6[%c0_8, %c0_9], %10 {strides = array<i32>} : memref<64x128xf32, #tpu.memory_space<vmem>>, vector<64x128xf32>,
    } else {
    }
    return
  }
  func.func @transform_0(%arg0: i32, %arg1: i32, %arg2: i32) -> (i32, i32) {
    %c0_i32 = arith.constant 0 : i32
    return %arg0, %arg2 : i32, i32
  }
  func.func @transform_1(%arg0: i32, %arg1: i32, %arg2: i32) -> (i32, i32) {
    %c0_i32 = arith.constant 0 : i32
    return %arg2, %arg1 : i32, i32
  }
  func.func @transform_2(%arg0: i32, %arg1: i32, %arg2: i32) -> (i32, i32) {
    %c0_i32 = arith.constant 0 : i32
    %c0_i32_0 = arith.constant 0 : i32
    return %c0_i32, %arg1 : i32, i32
  }
  func.func @transform_3(%arg0: i32, %arg1: i32, %arg2: i32) -> (i32, i32) {
    %c0_i32 = arith.constant 0 : i32
    return %arg0, %arg1 : i32, i32
  }
}

</mosaic_0001>

<llo_original>
// kernel: tpu_custom_call.1
$region0: #{tpu_custom_call.1}
  #allocation0 [shape = 'u32[]', space=smem, size = 0x4, offset = 0x4, fixed_abs, tag = 'smem constant byte address 0x4 - core index']
  #allocation1 [shape = 'u32[72,128]{1,0:T(1,128)}', space=vmem, size = 0x9000, scoped, tag = 'internal scratch']
  %s0 = inlined_call_operand.vmem [shape: bf16[64,16], index: 0, kind: input, shape index: {}]
  %s1 = inlined_call_operand.vmem [shape: bf16[16,128], index: 1, kind: input, shape index: {}]
  %s2 = inlined_call_operand.vmem [shape: f32[1,128], index: 2, kind: input, shape index: {}]
  %s3 = inlined_call_operand.hbm [shape: f32[64,128], index: 3, kind: output, shape index: {}]
  %s4 = sld [smem:[#allocation0]]
  $region30: #{tpu_custom_call.1} parent=0
    _
  %s6 = ssub.s32 1, %s4
  %s7 = scalar_select 0, %s6, %s4
  $region1: #{tpu_custom_call.1} parent=0
    #allocation2 [shape = 'u8[32768]{0}', space=vmem, size = 0x8000, scoped, tag = 'output window, operand 0, single buffered']
    #allocation3 [shape = 's32[1]{0}', space=sflag, size = 0x4, scoped, tag = 'scoped memory for tpu_custom_call.1']
    %8 = vsyncpa [#allocation3], 0
    // Predicated region
    $region2: #{tpu_custom_call.1} parent=1 // pred_check
      _
    $region3: #{tpu_custom_call.1} parent=1 // pred_check_branch
      %10 = sbr.rel (0) target = $region5
    $region4: #{tpu_custom_call.1} parent=1 // pred_region
      _
    $region5: #{tpu_custom_call.1} parent=1 // pred_fallthru
      _
    // Predicated region
    $region6: #{tpu_custom_call.1} parent=1 // pred_check
      _
    $region7: #{tpu_custom_call.1} parent=1 // pred_check_branch
      %12 = sbr.rel (0) target = $region9
    $region8: #{tpu_custom_call.1} parent=1 // pred_region
      _
    $region9: #{tpu_custom_call.1} parent=1 // pred_fallthru
      _
    // Predicated region
    $region10: #{tpu_custom_call.1} parent=1 // pred_check
      _
    $region11: #{tpu_custom_call.1} parent=1 // pred_check_branch
      %14 = sbr.rel (0) target = $region13
    $region12: #{tpu_custom_call.1} parent=1 // pred_region
      _
    $region13: #{tpu_custom_call.1} parent=1 // pred_fallthru
      _
    %v16 = vld [vmem:[%s0] sm:$0xf]
    %v17 = vld [vmem:[%s0 + $0x4] sm:$0xf]
    %v18 = vld [vmem:[%s0 + $0x8] sm:$0xf]
    %v19 = vld [vmem:[%s0 + $0xc] sm:$0xf]
    %v20 = vld [vmem:[%s0 + $0x10] sm:$0xf]
    %v21 = vld [vmem:[%s0 + $0x14] sm:$0xf]
    %v22 = vld [vmem:[%s0 + $0x18] sm:$0xf]
    %v23 = vld [vmem:[%s0 + $0x1c] sm:$0xf]
    %v24 = vld [vmem:[%s1] sm:$0xf]
    %v25 = vld [vmem:[%s1 + $0x4] sm:$0xf]
    %v34 = vunpack.c.l.b16 %v16
    %v35 = vunpack.c.l.b16 %v17
    %v36 = vunpack.c.l.b16 %v18
    %v37 = vunpack.c.l.b16 %v19
    %v38 = vunpack.c.l.b16 %v20
    %v39 = vunpack.c.l.b16 %v21
    %v40 = vunpack.c.l.b16 %v22
    %v41 = vunpack.c.l.b16 %v23
    %v42 = vpack.c.b16 %v35, %v34
    %v43 = vpack.c.b16 %v37, %v36
    %v44 = vpack.c.b16 %v39, %v38
    %v45 = vpack.c.b16 %v41, %v40
    %v48 = vunpack.c.l.b16 %v24
    %v49 = vunpack.c.l.b16 %v25
    %v50 = vpack.c.b16 %v49, %v48
    %vm52 = vcmask 130048
    %v54 = vsel %vm52, %v42, 0
    %v57 = vsel %vm52, %v43, 0
    %v60 = vsel %vm52, %v44, 0
    %v63 = vsel %vm52, %v45, 0
    %65 = vmatpush.bf16.msra.mxu0 0
    %66 = vmatpush.bf16.msra.mxu0 0
    %67 = vmatpush.bf16.msra.mxu0 0
    %68 = vmatpush.bf16.msra.mxu0 0
    %69 = vmatpush.bf16.msra.mxu0 0
    %70 = vmatpush.bf16.msra.mxu0 0
    %71 = vmatpush.bf16.msra.mxu0 0
    %72 = vmatpush.bf16.msra.mxu0 %v50
    %73 = vmatmul.bf16.gmra.mxu0 %v54
    %v74 = vpop.f32.mrf.mxu0
    %v75 = vadd.f32 0.0, %v74
    %v76 = vpop.f32.mrf.mxu0
    %v77 = vadd.f32 0.0, %v76
    %78 = vmatmul.bf16.gmra.mxu0 %v57
    %v79 = vpop.f32.mrf.mxu0
    %v80 = vadd.f32 0.0, %v79
    %v81 = vpop.f32.mrf.mxu0
    %v82 = vadd.f32 0.0, %v81
    %83 = vmatmul.bf16.gmra.mxu0 %v60
    %v84 = vpop.f32.mrf.mxu0
    %v85 = vadd.f32 0.0, %v84
    %v86 = vpop.f32.mrf.mxu0
    %v87 = vadd.f32 0.0, %v86
    %88 = vmatmul.bf16.gmra.mxu0 %v63
    %v89 = vpop.f32.mrf.mxu0
    %v90 = vadd.f32 0.0, %v89
    %v91 = vpop.f32.mrf.mxu0
    %v92 = vadd.f32 0.0, %v91
    %93 = vdwg.mxu0
    %p94 = scmp.eq.s32.totalorder 0, 0
    // Predicated region
    $region14: #{tpu_custom_call.1} parent=1 // pred_check
      %p95 = pneg %p94
    $region15: #{tpu_custom_call.1} parent=1 // pred_check_branch
      %97 = sbr.rel (%p95) target = $region17
    $region16: #{tpu_custom_call.1} parent=1 // pred_region
      %v98 = vld [vmem:[%s2] sm:$0x1]
      %v100 = vperm.slane %v98, 0
      %v102 = vadd.f32 %v75, %v100
      %v103 = vadd.f32 %v77, %v100
      %v104 = vadd.f32 %v80, %v100
      %v105 = vadd.f32 %v82, %v100
      %v106 = vadd.f32 %v85, %v100
      %v107 = vadd.f32 %v87, %v100
      %v108 = vadd.f32 %v90, %v100
      %v109 = vadd.f32 %v92, %v100
      %110 = vst [vmem:[#allocation2] sm:$0xff] %v102
      %111 = vst [vmem:[#allocation2 + $0x8] sm:$0xff] %v103
      %112 = vst [vmem:[#allocation2 + $0x10] sm:$0xff] %v104
      %113 = vst [vmem:[#allocation2 + $0x18] sm:$0xff] %v105
      %114 = vst [vmem:[#allocation2 + $0x20] sm:$0xff] %v106
      %115 = vst [vmem:[#allocation2 + $0x28] sm:$0xff] %v107
      %116 = vst [vmem:[#allocation2 + $0x30] sm:$0xff] %v108
      %117 = vst [vmem:[#allocation2 + $0x38] sm:$0xff] %v109
    $region17: #{tpu_custom_call.1} parent=1 // pred_fallthru
      _
    %p118 = scmp.ne.s32.totalorder 0, 0
    // Predicated region
    $region18: #{tpu_custom_call.1} parent=1 // pred_check
      %p119 = pneg %p118
    $region19: #{tpu_custom_call.1} parent=1 // pred_check_branch
      %121 = sbr.rel (%p119) target = $region21
    $region20: #{tpu_custom_call.1} parent=1 // pred_region
      %v122 = vld [vmem:[#allocation2] sm:$0xff]
      %v123 = vld [vmem:[#allocation2 + $0x8] sm:$0xff]
      %v124 = vld [vmem:[#allocation2 + $0x10] sm:$0xff]
      %v125 = vld [vmem:[#allocation2 + $0x18] sm:$0xff]
      %v126 = vld [vmem:[#allocation2 + $0x20] sm:$0xff]
      %v127 = vld [vmem:[#allocation2 + $0x28] sm:$0xff]
      %v128 = vld [vmem:[#allocation2 + $0x30] sm:$0xff]
      %v129 = vld [vmem:[#allocation2 + $0x38] sm:$0xff]
      %v130 = vadd.f32 %v122, %v75
      %v131 = vadd.f32 %v123, %v77
      %v132 = vadd.f32 %v124, %v80
      %v133 = vadd.f32 %v125, %v82
      %v134 = vadd.f32 %v126, %v85
      %v135 = vadd.f32 %v127, %v87
      %v136 = vadd.f32 %v128, %v90
      %v137 = vadd.f32 %v129, %v92
      %138 = vst [vmem:[#allocation2] sm:$0xff] %v130
      %139 = vst [vmem:[#allocation2 + $0x8] sm:$0xff] %v131
      %140 = vst [vmem:[#allocation2 + $0x10] sm:$0xff] %v132
      %141 = vst [vmem:[#allocation2 + $0x18] sm:$0xff] %v133
      %142 = vst [vmem:[#allocation2 + $0x20] sm:$0xff] %v134
      %143 = vst [vmem:[#allocation2 + $0x28] sm:$0xff] %v135
      %144 = vst [vmem:[#allocation2 + $0x30] sm:$0xff] %v136
      %145 = vst [vmem:[#allocation2 + $0x38] sm:$0xff] %v137
    $region21: #{tpu_custom_call.1} parent=1 // pred_fallthru
      _
    // Predicated region
    $region22: #{tpu_custom_call.1} parent=1 // pred_check
      _
    $region23: #{tpu_custom_call.1} parent=1 // pred_check_branch
      %147 = sbr.rel (0) target = $region25
    $region24: #{tpu_custom_call.1} parent=1 // pred_region
      %149 = vsyncadd [#allocation3], 0
      %s150 = sshll.u32 [#allocation2], 4
      %s151 = int_to_ptr.vmem [resolvable:$true] %s150
      %s152 = sshll.u32 %s3, 4
      %s153 = int_to_ptr.hbm [resolvable:$true] %s152
      %158 = dma.vmem_to_hbm [thread:$0]  %s151, 1024, %s153, [#allocation3], 128, 128, 8
    $region25: #{tpu_custom_call.1} parent=1 // pred_fallthru
      _
    // Predicated region
    $region26: #{tpu_custom_call.1} parent=1 // pred_check
      _
    $region27: #{tpu_custom_call.1} parent=1 // pred_check_branch
      %160 = sbr.rel (0) target = $region29
    $region28: #{tpu_custom_call.1} parent=1 // pred_region
      %162 = dma.done [#allocation3], 1024
    $region29: #{tpu_custom_call.1} parent=1 // pred_fallthru
      _
    %163 = vsyncpa [#allocation3], 1

</llo_original>
